<compile_context>
chip_gen: v6e
topology: v6e:2x2x1
jax: 0.10.0
libtpu: 0.0.40
codegen_flags: <defaults>
</compile_context>

<pallas_src>
import jax
import jax.numpy as jnp
from jax.experimental import pallas as pl
from jax.experimental.pallas import tpu as pltpu


def _make_fused_kernel(depth, in_channels, out_channels, kernel_size, length,
                       pad_left):
    """Build the fused depth-layer conv1d('same')+ReLU kernel body."""
    K, L, Cout = kernel_size, length, out_channels

    def kernel(*refs):
        x_ref = refs[0]                       # (BB, L, Cin0)
        wb_refs = refs[1:1 + 2 * depth]       # [(K,Cin_i,Cout), (1,Cout)] * depth
        o_ref = refs[1 + 2 * depth]           # (BB, L, Cout)
        buf_ref = refs[2 + 2 * depth]         # VMEM scratch (BB, L+K-1, Cmax) f32
        BB = x_ref.shape[0]

        # In-kernel 'same' padding: zero the padded activation buffer once;
        # only the interior rows are ever written, so the halo rows stay zero
        # for every layer.
        buf_ref[...] = jnp.zeros_like(buf_ref)
        buf_ref[:, pad_left:pad_left + L, :in_channels[0]] = (
            x_ref[...].astype(jnp.float32))

        for layer in range(depth):
            cin = in_channels[layer]
            w_ref = wb_refs[2 * layer]        # (K, cin, Cout)
            b_ref = wb_refs[2 * layer + 1]    # (1, Cout)

            xp = buf_ref[...]                 # one VMEM load per layer
            acc = jnp.zeros((BB * L, Cout), jnp.float32)
            for k in range(K):                # K is small & static -> unrolled
                xk = xp[:, k:k + L, :cin].reshape(BB * L, cin)
                acc = acc + jnp.dot(xk, w_ref[k],
                                    preferred_element_type=jnp.float32)
            y = jnp.maximum(acc + b_ref[...], 0.0)   # bias + ReLU in f32

            if layer + 1 < depth:
                # Intermediate activation stays in VMEM (never round-trips HBM).
                buf_ref[:, pad_left:pad_left + L, :Cout] = y.reshape(BB, L, Cout)
            else:
                o_ref[...] = y.reshape(BB, L, Cout).astype(o_ref.dtype)

    return kernel


def cnn1d_single_chain(x_ncl, params, *, batch_block=None):
    """Forward pass. x_ncl: (B, Cin, L) (torch NCL). Returns (B, Cout, L).

    All layers run inside ONE pallas_call; only the input and final output
    touch HBM. batch_block (default: whole batch) controls the per-grid-step
    batch tile (set < B to split across TensorCores on v7x if B/L scale up).
    """
    B, Cin0, L = x_ncl.shape
    depth = len(params)
    K = params[0][0].shape[0]
    Cout = params[0][0].shape[2]
    pad_left = (K - 1) // 2
    Lp = L + K - 1
    Cmax = max(Cin0, Cout)

    bb = B if batch_block is None else batch_block
    assert B % bb == 0, "batch_block must divide batch"

    in_channels = tuple(w.shape[1] for (w, _) in params)

    # NCL -> NLC so channels map to lanes and each conv tap is an MXU matmul.
    x_nlc = jnp.transpose(x_ncl, (0, 2, 1))

    kernel = _make_fused_kernel(depth, in_channels, Cout, K, L, pad_left)

    in_specs = [pl.BlockSpec((bb, L, Cin0), lambda i: (i, 0, 0))]
    args = [x_nlc]
    for (w, b) in params:
        in_specs.append(pl.BlockSpec(w.shape, lambda i: (0, 0, 0)))
        in_specs.append(pl.BlockSpec(b.shape, lambda i: (0, 0)))
        args.append(w)
        args.append(b)

    out_nlc = pl.pallas_call(
        kernel,
        out_shape=jax.ShapeDtypeStruct((B, L, Cout), x_ncl.dtype),
        grid=(B // bb,),
        in_specs=in_specs,
        out_specs=pl.BlockSpec((bb, L, Cout), lambda i: (i, 0, 0)),
        scratch_shapes=[pltpu.VMEM((bb, Lp, Cmax), jnp.float32)],
        compiler_params=pltpu.CompilerParams(
            dimension_semantics=("parallel",)),
    )(*args)

    return jnp.transpose(out_nlc, (0, 2, 1))  # NLC -> NCL


def init_params(key, depth=3, input_filters=2, output_filters=16, kernel_size=3):
    """Deterministic synthetic params. Weight layout (K, Cin, Cout)
    (equivalent to torch Conv1d weight (Cout, Cin, K) transposed)."""
    in_filters = [input_filters] + [output_filters] * (depth - 1)
    params = []
    for i in range(depth):
        key, kw, kb = jax.random.split(key, 3)
        fan_in = in_filters[i] * kernel_size
        scale = 1.0 / jnp.sqrt(jnp.float32(fan_in))
        w = jax.random.uniform(
            kw, (kernel_size, in_filters[i], output_filters),
            dtype=jnp.float32, minval=-scale, maxval=scale)
        bvec = jax.random.uniform(
            kb, (1, output_filters),
            dtype=jnp.float32, minval=-scale, maxval=scale)
        params.append((w, bvec))
    return params


def _reference_forward(x_ncl, params):
    """Pure-JAX (XLA conv) reference of the PyTorch module."""
    y = x_ncl
    for (w, b) in params:
        w_oik = jnp.transpose(w, (2, 1, 0))  # (Cout, Cin, K)
        y = jax.lax.conv_general_dilated(
            y, w_oik, window_strides=(1,), padding="SAME",
            dimension_numbers=("NCH", "OIH", "NCH"))
        y = jnp.maximum(y + b.reshape(1, -1, 1), 0.0)
    return y


if __name__ == "__main__":
    key = jax.random.PRNGKey(0)
    kx, kp = jax.random.split(key)

    B, Cin, L = 2, 2, 16  # matches default input_filters=2
    x = jax.random.normal(kx, (B, Cin, L), dtype=jnp.float32)

    params = init_params(kp, depth=3, input_filters=2,
                         output_filters=16, kernel_size=3)

    out = cnn1d_single_chain(x, params)
    out = jax.block_until_ready(out)
    assert out.shape == (B, 16, L), out.shape

    ref = _reference_forward(x, params)
    max_err = float(jnp.max(jnp.abs(out - ref)))
    assert jnp.allclose(out, ref, atol=1e-4, rtol=1e-4), max_err

    print("KERNEL_OK")
</pallas_src>

<mosaic_0001>
module attributes {stable_mosaic.version = 11 : i64} {
  func.func @kernel(%arg0: i32, %arg1: memref<2x16x2xf32, #tpu.memory_space<vmem>>, %arg2: memref<3x2x16xf32, #tpu.memory_space<vmem>>, %arg3: memref<1x16xf32, #tpu.memory_space<vmem>>, %arg4: memref<3x16x16xf32, #tpu.memory_space<vmem>>, %arg5: memref<1x16xf32, #tpu.memory_space<vmem>>, %arg6: memref<3x16x16xf32, #tpu.memory_space<vmem>>, %arg7: memref<1x16xf32, #tpu.memory_space<vmem>>, %arg8: memref<2x16x16xf32, #tpu.memory_space<vmem>>, %arg9: memref<2x18x16xf32, #tpu.memory_space<vmem>>) attributes {dimension_semantics = [#tpu.dimension_semantics<parallel>], iteration_bounds = array<i64: 1>, scalar_prefetch = 0 : i64, scratch_operands = 1 : i64, tpu.core_type = #tpu.core_type<tc>, window_params = [{transform_indices = @transform_0, window_bounds = array<i64: 2, 16, 2>}, {pipeline_mode = #tpu.pipeline_mode<synchronous>, transform_indices = @transform_1, window_bounds = array<i64: 3, 2, 16>}, {pipeline_mode = #tpu.pipeline_mode<synchronous>, transform_indices = @transform_2, window_bounds = array<i64: 1, 16>}, {pipeline_mode = #tpu.pipeline_mode<synchronous>, transform_indices = @transform_3, window_bounds = array<i64: 3, 16, 16>}, {pipeline_mode = #tpu.pipeline_mode<synchronous>, transform_indices = @transform_4, window_bounds = array<i64: 1, 16>}, {pipeline_mode = #tpu.pipeline_mode<synchronous>, transform_indices = @transform_5, window_bounds = array<i64: 3, 16, 16>}, {pipeline_mode = #tpu.pipeline_mode<synchronous>, transform_indices = @transform_6, window_bounds = array<i64: 1, 16>}, {transform_indices = @transform_7, window_bounds = array<i64: 2, 16, 16>}]} {
    %cst = arith.constant 0.000000e+00 : f32
    %0 = vector.broadcast %cst : f32 to vector<2x18x16xf32>
    %c0 = arith.constant 0 : index
    %c0_0 = arith.constant 0 : index
    %c0_1 = arith.constant 0 : index
    %1 = vector.load %arg9[%c0, %c0_0, %c0_1] : memref<2x18x16xf32, #tpu.memory_space<vmem>>, vector<2x18x16xf32>
    tpu.vector_store %arg9[%c0, %c0_0, %c0_1], %0 {strides = array<i32>} : memref<2x18x16xf32, #tpu.memory_space<vmem>>, vector<2x18x16xf32>,
    %c0_2 = arith.constant 0 : index
    %c0_3 = arith.constant 0 : index
    %c0_4 = arith.constant 0 : index
    %2 = vector.load %arg1[%c0_2, %c0_3, %c0_4] : memref<2x16x2xf32, #tpu.memory_space<vmem>>, vector<2x16x2xf32>
    %c0_5 = arith.constant 0 : index
    %c1 = arith.constant 1 : index
    %c0_6 = arith.constant 0 : index
    %3 = vector.load %arg9[%c0_5, %c1, %c0_6] : memref<2x18x16xf32, #tpu.memory_space<vmem>>, vector<2x16x2xf32>
    tpu.vector_store %arg9[%c0_5, %c1, %c0_6], %2 {strides = array<i32>} : memref<2x18x16xf32, #tpu.memory_space<vmem>>, vector<2x16x2xf32>,
    %c0_7 = arith.constant 0 : index
    %c0_8 = arith.constant 0 : index
    %c0_9 = arith.constant 0 : index
    %4 = vector.load %arg9[%c0_7, %c0_8, %c0_9] : memref<2x18x16xf32, #tpu.memory_space<vmem>>, vector<2x18x16xf32>
    %cst_10 = arith.constant 0.000000e+00 : f32
    %5 = vector.broadcast %cst_10 : f32 to vector<32x16xf32>
    %6 = vector.extract_strided_slice %4 {offsets = [0, 0, 0], sizes = [2, 16, 2], strides = [1, 1, 1]} : vector<2x18x16xf32> to vector<2x16x2xf32>
    %7 = vector.shape_cast %6 : vector<2x16x2xf32> to vector<32x2xf32>
    %c0_11 = arith.constant 0 : index
    %c0_12 = arith.constant 0 : index
    %c0_13 = arith.constant 0 : index
    %8 = vector.load %arg2[%c0_11, %c0_12, %c0_13] : memref<3x2x16xf32, #tpu.memory_space<vmem>>, vector<1x2x16xf32>
    %9 = vector.shape_cast %8 : vector<1x2x16xf32> to vector<2x16xf32>
    %cst_14 = arith.constant dense<0.000000e+00> : vector<32x16xf32>
    %10 = tpu.matmul %7, %9, %cst_14 {dimension_numbers = #tpu.dot_dimension_numbers<[1], [0], [0], [1], [0, 0, 1, 1], [], []>} : vector<32x2xf32>, vector<2x16xf32>, vector<32x16xf32> -> vector<32x16xf32>
    %11 = arith.addf %5, %10 : vector<32x16xf32>
    %12 = vector.extract_strided_slice %4 {offsets = [0, 1, 0], sizes = [2, 16, 2], strides = [1, 1, 1]} : vector<2x18x16xf32> to vector<2x16x2xf32>
    %13 = vector.shape_cast %12 : vector<2x16x2xf32> to vector<32x2xf32>
    %c1_15 = arith.constant 1 : index
    %c0_16 = arith.constant 0 : index
    %c0_17 = arith.constant 0 : index
    %14 = vector.load %arg2[%c1_15, %c0_16, %c0_17] : memref<3x2x16xf32, #tpu.memory_space<vmem>>, vector<1x2x16xf32>
    %15 = vector.shape_cast %14 : vector<1x2x16xf32> to vector<2x16xf32>
    %cst_18 = arith.constant dense<0.000000e+00> : vector<32x16xf32>
    %16 = tpu.matmul %13, %15, %cst_18 {dimension_numbers = #tpu.dot_dimension_numbers<[1], [0], [0], [1], [0, 0, 1, 1], [], []>} : vector<32x2xf32>, vector<2x16xf32>, vector<32x16xf32> -> vector<32x16xf32>
    %17 = arith.addf %11, %16 : vector<32x16xf32>
    %18 = vector.extract_strided_slice %4 {offsets = [0, 2, 0], sizes = [2, 16, 2], strides = [1, 1, 1]} : vector<2x18x16xf32> to vector<2x16x2xf32>
    %19 = vector.shape_cast %18 : vector<2x16x2xf32> to vector<32x2xf32>
    %c2 = arith.constant 2 : index
    %c0_19 = arith.constant 0 : index
    %c0_20 = arith.constant 0 : index
    %20 = vector.load %arg2[%c2, %c0_19, %c0_20] : memref<3x2x16xf32, #tpu.memory_space<vmem>>, vector<1x2x16xf32>
    %21 = vector.shape_cast %20 : vector<1x2x16xf32> to vector<2x16xf32>
    %cst_21 = arith.constant dense<0.000000e+00> : vector<32x16xf32>
    %22 = tpu.matmul %19, %21, %cst_21 {dimension_numbers = #tpu.dot_dimension_numbers<[1], [0], [0], [1], [0, 0, 1, 1], [], []>} : vector<32x2xf32>, vector<2x16xf32>, vector<32x16xf32> -> vector<32x16xf32>
    %23 = arith.addf %17, %22 : vector<32x16xf32>
    %c0_22 = arith.constant 0 : index
    %c0_23 = arith.constant 0 : index
    %24 = vector.load %arg3[%c0_22, %c0_23] : memref<1x16xf32, #tpu.memory_space<vmem>>, vector<1x16xf32>
    %25 = vector.broadcast %24 : vector<1x16xf32> to vector<32x16xf32>
    %26 = arith.addf %23, %25 : vector<32x16xf32>
    %cst_24 = arith.constant 0.000000e+00 : f32
    %27 = vector.broadcast %cst_24 : f32 to vector<32x16xf32>
    %28 = arith.maximumf %26, %27 : vector<32x16xf32>
    %29 = vector.shape_cast %28 : vector<32x16xf32> to vector<2x16x16xf32>
    %c0_25 = arith.constant 0 : index
    %c1_26 = arith.constant 1 : index
    %c0_27 = arith.constant 0 : index
    %30 = vector.load %arg9[%c0_25, %c1_26, %c0_27] : memref<2x18x16xf32, #tpu.memory_space<vmem>>, vector<2x16x16xf32>
    tpu.vector_store %arg9[%c0_25, %c1_26, %c0_27], %29 {strides = array<i32>} : memref<2x18x16xf32, #tpu.memory_space<vmem>>, vector<2x16x16xf32>,
    %c0_28 = arith.constant 0 : index
    %c0_29 = arith.constant 0 : index
    %c0_30 = arith.constant 0 : index
    %31 = vector.load %arg9[%c0_28, %c0_29, %c0_30] : memref<2x18x16xf32, #tpu.memory_space<vmem>>, vector<2x18x16xf32>
    %cst_31 = arith.constant 0.000000e+00 : f32
    %32 = vector.broadcast %cst_31 : f32 to vector<32x16xf32>
    %33 = vector.extract_strided_slice %31 {offsets = [0, 0, 0], sizes = [2, 16, 16], strides = [1, 1, 1]} : vector<2x18x16xf32> to vector<2x16x16xf32>
    %34 = vector.shape_cast %33 : vector<2x16x16xf32> to vector<32x16xf32>
    %c0_32 = arith.constant 0 : index
    %c0_33 = arith.constant 0 : index
    %c0_34 = arith.constant 0 : index
    %35 = vector.load %arg4[%c0_32, %c0_33, %c0_34] : memref<3x16x16xf32, #tpu.memory_space<vmem>>, vector<1x16x16xf32>
    %36 = vector.shape_cast %35 : vector<1x16x16xf32> to vector<16x16xf32>
    %cst_35 = arith.constant dense<0.000000e+00> : vector<32x16xf32>
    %37 = tpu.matmul %34, %36, %cst_35 {dimension_numbers = #tpu.dot_dimension_numbers<[1], [0], [0], [1], [0, 0, 1, 1], [], []>} : vector<32x16xf32>, vector<16x16xf32>, vector<32x16xf32> -> vector<32x16xf32>
    %38 = arith.addf %32, %37 : vector<32x16xf32>
    %39 = vector.extract_strided_slice %31 {offsets = [0, 1, 0], sizes = [2, 16, 16], strides = [1, 1, 1]} : vector<2x18x16xf32> to vector<2x16x16xf32>
    %40 = vector.shape_cast %39 : vector<2x16x16xf32> to vector<32x16xf32>
    %c1_36 = arith.constant 1 : index
    %c0_37 = arith.constant 0 : index
    %c0_38 = arith.constant 0 : index
    %41 = vector.load %arg4[%c1_36, %c0_37, %c0_38] : memref<3x16x16xf32, #tpu.memory_space<vmem>>, vector<1x16x16xf32>
    %42 = vector.shape_cast %41 : vector<1x16x16xf32> to vector<16x16xf32>
    %cst_39 = arith.constant dense<0.000000e+00> : vector<32x16xf32>
    %43 = tpu.matmul %40, %42, %cst_39 {dimension_numbers = #tpu.dot_dimension_numbers<[1], [0], [0], [1], [0, 0, 1, 1], [], []>} : vector<32x16xf32>, vector<16x16xf32>, vector<32x16xf32> -> vector<32x16xf32>
    %44 = arith.addf %38, %43 : vector<32x16xf32>
    %45 = vector.extract_strided_slice %31 {offsets = [0, 2, 0], sizes = [2, 16, 16], strides = [1, 1, 1]} : vector<2x18x16xf32> to vector<2x16x16xf32>
    %46 = vector.shape_cast %45 : vector<2x16x16xf32> to vector<32x16xf32>
    %c2_40 = arith.constant 2 : index
    %c0_41 = arith.constant 0 : index
    %c0_42 = arith.constant 0 : index
    %47 = vector.load %arg4[%c2_40, %c0_41, %c0_42] : memref<3x16x16xf32, #tpu.memory_space<vmem>>, vector<1x16x16xf32>
    %48 = vector.shape_cast %47 : vector<1x16x16xf32> to vector<16x16xf32>
    %cst_43 = arith.constant dense<0.000000e+00> : vector<32x16xf32>
    %49 = tpu.matmul %46, %48, %cst_43 {dimension_numbers = #tpu.dot_dimension_numbers<[1], [0], [0], [1], [0, 0, 1, 1], [], []>} : vector<32x16xf32>, vector<16x16xf32>, vector<32x16xf32> -> vector<32x16xf32>
    %50 = arith.addf %44, %49 : vector<32x16xf32>
    %c0_44 = arith.constant 0 : index
    %c0_45 = arith.constant 0 : index
    %51 = vector.load %arg5[%c0_44, %c0_45] : memref<1x16xf32, #tpu.memory_space<vmem>>, vector<1x16xf32>
    %52 = vector.broadcast %51 : vector<1x16xf32> to vector<32x16xf32>
    %53 = arith.addf %50, %52 : vector<32x16xf32>
    %cst_46 = arith.constant 0.000000e+00 : f32
    %54 = vector.broadcast %cst_46 : f32 to vector<32x16xf32>
    %55 = arith.maximumf %53, %54 : vector<32x16xf32>
    %56 = vector.shape_cast %55 : vector<32x16xf32> to vector<2x16x16xf32>
    %c0_47 = arith.constant 0 : index
    %c1_48 = arith.constant 1 : index
    %c0_49 = arith.constant 0 : index
    %57 = vector.load %arg9[%c0_47, %c1_48, %c0_49] : memref<2x18x16xf32, #tpu.memory_space<vmem>>, vector<2x16x16xf32>
    tpu.vector_store %arg9[%c0_47, %c1_48, %c0_49], %56 {strides = array<i32>} : memref<2x18x16xf32, #tpu.memory_space<vmem>>, vector<2x16x16xf32>,
    %c0_50 = arith.constant 0 : index
    %c0_51 = arith.constant 0 : index
    %c0_52 = arith.constant 0 : index
    %58 = vector.load %arg9[%c0_50, %c0_51, %c0_52] : memref<2x18x16xf32, #tpu.memory_space<vmem>>, vector<2x18x16xf32>
    %cst_53 = arith.constant 0.000000e+00 : f32
    %59 = vector.broadcast %cst_53 : f32 to vector<32x16xf32>
    %60 = vector.extract_strided_slice %58 {offsets = [0, 0, 0], sizes = [2, 16, 16], strides = [1, 1, 1]} : vector<2x18x16xf32> to vector<2x16x16xf32>
    %61 = vector.shape_cast %60 : vector<2x16x16xf32> to vector<32x16xf32>
    %c0_54 = arith.constant 0 : index
    %c0_55 = arith.constant 0 : index
    %c0_56 = arith.constant 0 : index
    %62 = vector.load %arg6[%c0_54, %c0_55, %c0_56] : memref<3x16x16xf32, #tpu.memory_space<vmem>>, vector<1x16x16xf32>
    %63 = vector.shape_cast %62 : vector<1x16x16xf32> to vector<16x16xf32>
    %cst_57 = arith.constant dense<0.000000e+00> : vector<32x16xf32>
    %64 = tpu.matmul %61, %63, %cst_57 {dimension_numbers = #tpu.dot_dimension_numbers<[1], [0], [0], [1], [0, 0, 1, 1], [], []>} : vector<32x16xf32>, vector<16x16xf32>, vector<32x16xf32> -> vector<32x16xf32>
    %65 = arith.addf %59, %64 : vector<32x16xf32>
    %66 = vector.extract_strided_slice %58 {offsets = [0, 1, 0], sizes = [2, 16, 16], strides = [1, 1, 1]} : vector<2x18x16xf32> to vector<2x16x16xf32>
    %67 = vector.shape_cast %66 : vector<2x16x16xf32> to vector<32x16xf32>
    %c1_58 = arith.constant 1 : index
    %c0_59 = arith.constant 0 : index
    %c0_60 = arith.constant 0 : index
    %68 = vector.load %arg6[%c1_58, %c0_59, %c0_60] : memref<3x16x16xf32, #tpu.memory_space<vmem>>, vector<1x16x16xf32>
    %69 = vector.shape_cast %68 : vector<1x16x16xf32> to vector<16x16xf32>
    %cst_61 = arith.constant dense<0.000000e+00> : vector<32x16xf32>
    %70 = tpu.matmul %67, %69, %cst_61 {dimension_numbers = #tpu.dot_dimension_numbers<[1], [0], [0], [1], [0, 0, 1, 1], [], []>} : vector<32x16xf32>, vector<16x16xf32>, vector<32x16xf32> -> vector<32x16xf32>
    %71 = arith.addf %65, %70 : vector<32x16xf32>
    %72 = vector.extract_strided_slice %58 {offsets = [0, 2, 0], sizes = [2, 16, 16], strides = [1, 1, 1]} : vector<2x18x16xf32> to vector<2x16x16xf32>
    %73 = vector.shape_cast %72 : vector<2x16x16xf32> to vector<32x16xf32>
    %c2_62 = arith.constant 2 : index
    %c0_63 = arith.constant 0 : index
    %c0_64 = arith.constant 0 : index
    %74 = vector.load %arg6[%c2_62, %c0_63, %c0_64] : memref<3x16x16xf32, #tpu.memory_space<vmem>>, vector<1x16x16xf32>
    %75 = vector.shape_cast %74 : vector<1x16x16xf32> to vector<16x16xf32>
    %cst_65 = arith.constant dense<0.000000e+00> : vector<32x16xf32>
    %76 = tpu.matmul %73, %75, %cst_65 {dimension_numbers = #tpu.dot_dimension_numbers<[1], [0], [0], [1], [0, 0, 1, 1], [], []>} : vector<32x16xf32>, vector<16x16xf32>, vector<32x16xf32> -> vector<32x16xf32>
    %77 = arith.addf %71, %76 : vector<32x16xf32>
    %c0_66 = arith.constant 0 : index
    %c0_67 = arith.constant 0 : index
    %78 = vector.load %arg7[%c0_66, %c0_67] : memref<1x16xf32, #tpu.memory_space<vmem>>, vector<1x16xf32>
    %79 = vector.broadcast %78 : vector<1x16xf32> to vector<32x16xf32>
    %80 = arith.addf %77, %79 : vector<32x16xf32>
    %cst_68 = arith.constant 0.000000e+00 : f32
    %81 = vector.broadcast %cst_68 : f32 to vector<32x16xf32>
    %82 = arith.maximumf %80, %81 : vector<32x16xf32>
    %83 = vector.shape_cast %82 : vector<32x16xf32> to vector<2x16x16xf32>
    %c0_69 = arith.constant 0 : index
    %c0_70 = arith.constant 0 : index
    %c0_71 = arith.constant 0 : index
    %84 = vector.load %arg8[%c0_69, %c0_70, %c0_71] : memref<2x16x16xf32, #tpu.memory_space<vmem>>, vector<2x16x16xf32>
    tpu.vector_store %arg8[%c0_69, %c0_70, %c0_71], %83 {strides = array<i32>} : memref<2x16x16xf32, #tpu.memory_space<vmem>>, vector<2x16x16xf32>,
    return
  }
  func.func @transform_0(%arg0: i32) -> (i32, i32, i32) {
    %c0_i32 = arith.constant 0 : i32
    %c0_i32_0 = arith.constant 0 : i32
    %c0_i32_1 = arith.constant 0 : i32
    return %arg0, %c0_i32, %c0_i32_0 : i32, i32, i32
  }
  func.func @transform_1(%arg0: i32) -> (i32, i32, i32) {
    %c0_i32 = arith.constant 0 : i32
    %c0_i32_0 = arith.constant 0 : i32
    %c0_i32_1 = arith.constant 0 : i32
    %c0_i32_2 = arith.constant 0 : i32
    return %c0_i32, %c0_i32_0, %c0_i32_1 : i32, i32, i32
  }
  func.func @transform_2(%arg0: i32) -> (i32, i32) {
    %c0_i32 = arith.constant 0 : i32
    %c0_i32_0 = arith.constant 0 : i32
    %c0_i32_1 = arith.constant 0 : i32
    return %c0_i32, %c0_i32_0 : i32, i32
  }
  func.func @transform_3(%arg0: i32) -> (i32, i32, i32) {
    %c0_i32 = arith.constant 0 : i32
    %c0_i32_0 = arith.constant 0 : i32
    %c0_i32_1 = arith.constant 0 : i32
    %c0_i32_2 = arith.constant 0 : i32
    return %c0_i32, %c0_i32_0, %c0_i32_1 : i32, i32, i32
  }
  func.func @transform_4(%arg0: i32) -> (i32, i32) {
    %c0_i32 = arith.constant 0 : i32
    %c0_i32_0 = arith.constant 0 : i32
    %c0_i32_1 = arith.constant 0 : i32
    return %c0_i32, %c0_i32_0 : i32, i32
  }
  func.func @transform_5(%arg0: i32) -> (i32, i32, i32) {
    %c0_i32 = arith.constant 0 : i32
    %c0_i32_0 = arith.constant 0 : i32
    %c0_i32_1 = arith.constant 0 : i32
    %c0_i32_2 = arith.constant 0 : i32
    return %c0_i32, %c0_i32_0, %c0_i32_1 : i32, i32, i32
  }
  func.func @transform_6(%arg0: i32) -> (i32, i32) {
    %c0_i32 = arith.constant 0 : i32
    %c0_i32_0 = arith.constant 0 : i32
    %c0_i32_1 = arith.constant 0 : i32
    return %c0_i32, %c0_i32_0 : i32, i32
  }
  func.func @transform_7(%arg0: i32) -> (i32, i32, i32) {
    %c0_i32 = arith.constant 0 : i32
    %c0_i32_0 = arith.constant 0 : i32
    %c0_i32_1 = arith.constant 0 : i32
    return %arg0, %c0_i32, %c0_i32_0 : i32, i32, i32
  }
}

</mosaic_0001>

<llo_original>
// kernel: tpu_custom_call.1
$region0: #{tpu_custom_call.1}
  #allocation0 [shape = 'u32[]', space=smem, size = 0x4, offset = 0x4, fixed_abs, tag = 'smem constant byte address 0x4 - core index']
  #allocation1 [shape = 'u32[144,128]{1,0:T(1,128)}', space=vmem, size = 0x12000, scoped, tag = 'internal scratch']
  #allocation2 [shape = 'f32[2,18,16]{2,1,0:T(8,128)}', space=vmem, size = 0x6000, scoped, tag = 'scratch operand']
  %s0 = inlined_call_operand.vmem [shape: f32[2,16,2], index: 0, kind: input, shape index: {}]
  %s1 = inlined_call_operand.vmem [shape: f32[3,2,16], index: 1, kind: input, shape index: {}]
  %s2 = inlined_call_operand.vmem [shape: f32[1,16], index: 2, kind: input, shape index: {}]
  %s3 = inlined_call_operand.hbm [shape: f32[3,16,16], index: 3, kind: input, shape index: {}]
  %s4 = inlined_call_operand.vmem [shape: f32[1,16], index: 4, kind: input, shape index: {}]
  %s5 = inlined_call_operand.hbm [shape: f32[3,16,16], index: 5, kind: input, shape index: {}]
  %s6 = inlined_call_operand.vmem [shape: f32[1,16], index: 6, kind: input, shape index: {}]
  %s7 = inlined_call_operand.hbm [shape: f32[2,16,16], index: 7, kind: output, shape index: {}]
  %s8 = sld [smem:[#allocation0]]
  $region46: #{tpu_custom_call.1} parent=0
    _
  %s10 = ssub.s32 1, %s8
  %s11 = scalar_select 0, %s10, %s8
  $region1: #{tpu_custom_call.1} parent=0
    #allocation3 [shape = 'u8[24576]{0}', space=vmem, size = 0x6000, scoped, tag = 'input window, operand 3, single buffered']
    #allocation4 [shape = 's32[1]{0}', space=sflag, size = 0x4, scoped, tag = 'scoped memory for tpu_custom_call.1']
    #allocation5 [shape = 's32[1]{0}', space=sflag, size = 0x4, scoped, tag = 'scoped memory for tpu_custom_call.1']
    #allocation6 [shape = 'u8[24576]{0}', space=vmem, size = 0x6000, scoped, tag = 'input window, operand 5, single buffered']
    #allocation7 [shape = 's32[1]{0}', space=sflag, size = 0x4, scoped, tag = 'scoped memory for tpu_custom_call.1']
    #allocation8 [shape = 'u8[16384]{0}', space=vmem, size = 0x4000, scoped, tag = 'output window, operand 0, single buffered']
    %12 = vsyncpa [#allocation4], 0
    %13 = vsyncpa [#allocation7], 0
    %14 = vsyncpa [#allocation5], 0
    // Predicated region
    $region2: #{tpu_custom_call.1} parent=1 // pred_check
      _
    $region3: #{tpu_custom_call.1} parent=1 // pred_check_branch
      %16 = sbr.rel (0) target = $region5
    $region4: #{tpu_custom_call.1} parent=1 // pred_region
      _
    $region5: #{tpu_custom_call.1} parent=1 // pred_fallthru
      _
    // Predicated region
    $region6: #{tpu_custom_call.1} parent=1 // pred_check
      _
    $region7: #{tpu_custom_call.1} parent=1 // pred_check_branch
      %18 = sbr.rel (0) target = $region9
    $region8: #{tpu_custom_call.1} parent=1 // pred_region
      _
    $region9: #{tpu_custom_call.1} parent=1 // pred_fallthru
      _
    // Predicated region
    $region10: #{tpu_custom_call.1} parent=1 // pred_check
      _
    $region11: #{tpu_custom_call.1} parent=1 // pred_check_branch
      %20 = sbr.rel (0) target = $region13
    $region12: #{tpu_custom_call.1} parent=1 // pred_region
      _
    $region13: #{tpu_custom_call.1} parent=1 // pred_fallthru
      _
    // Predicated region
    $region14: #{tpu_custom_call.1} parent=1 // pred_check
      _
    $region15: #{tpu_custom_call.1} parent=1 // pred_check_branch
      %22 = sbr.rel (0) target = $region17
    $region16: #{tpu_custom_call.1} parent=1 // pred_region
      %s24 = ssub.s32 768, 768
      %25 = vsyncadd [#allocation4], %s24
      %s26 = sshll.u32 [#allocation3], 4
      %s27 = int_to_ptr.vmem [resolvable:$true] %s26
      %32 = dma.hbm_to_vmem [thread:$0]  %s3, 768, %s27, [#allocation4], 128, 128, 8
    $region17: #{tpu_custom_call.1} parent=1 // pred_fallthru
      _
    // Predicated region
    $region18: #{tpu_custom_call.1} parent=1 // pred_check
      _
    $region19: #{tpu_custom_call.1} parent=1 // pred_check_branch
      %34 = sbr.rel (0) target = $region21
    $region20: #{tpu_custom_call.1} parent=1 // pred_region
      _
    $region21: #{tpu_custom_call.1} parent=1 // pred_fallthru
      _
    // Predicated region
    $region22: #{tpu_custom_call.1} parent=1 // pred_check
      _
    $region23: #{tpu_custom_call.1} parent=1 // pred_check_branch
      %36 = sbr.rel (0) target = $region25
    $region24: #{tpu_custom_call.1} parent=1 // pred_region
      %s38 = ssub.s32 768, 768
      %39 = vsyncadd [#allocation7], %s38
      %s40 = sshll.u32 [#allocation6], 4
      %s41 = int_to_ptr.vmem [resolvable:$true] %s40
      %46 = dma.hbm_to_vmem [thread:$0]  %s5, 768, %s41, [#allocation7], 128, 128, 8
    $region25: #{tpu_custom_call.1} parent=1 // pred_fallthru
      _
    // Predicated region
    $region26: #{tpu_custom_call.1} parent=1 // pred_check
      _
    $region27: #{tpu_custom_call.1} parent=1 // pred_check_branch
      %48 = sbr.rel (0) target = $region29
    $region28: #{tpu_custom_call.1} parent=1 // pred_region
      _
    $region29: #{tpu_custom_call.1} parent=1 // pred_fallthru
      _
    // Predicated region
    $region30: #{tpu_custom_call.1} parent=1 // pred_check
      _
    $region31: #{tpu_custom_call.1} parent=1 // pred_check_branch
      %50 = sbr.rel (0) target = $region33
    $region32: #{tpu_custom_call.1} parent=1 // pred_region
      %51 = dma.done [#allocation4], 768
    $region33: #{tpu_custom_call.1} parent=1 // pred_fallthru
      _
    // Predicated region
    $region34: #{tpu_custom_call.1} parent=1 // pred_check
      _
    $region35: #{tpu_custom_call.1} parent=1 // pred_check_branch
      %53 = sbr.rel (0) target = $region37
    $region36: #{tpu_custom_call.1} parent=1 // pred_region
      %54 = dma.done [#allocation7], 768
    $region37: #{tpu_custom_call.1} parent=1 // pred_fallthru
      _
    %vm55 = vcmask 130048
    %56 = vst.msk [vmem:[#allocation2] sm:$0xff] %vm55, 0.0
    %57 = vst.msk [vmem:[#allocation2 + $0x8] sm:$0xff] %vm55, 0.0
    %vm58 = vcmask 123904
    %59 = vst.msk [vmem:[#allocation2 + $0x10] sm:$0x3] %vm58, 0.0
    %60 = vst.msk [vmem:[#allocation2 + $0x18] sm:$0xff] %vm55, 0.0
    %61 = vst.msk [vmem:[#allocation2 + $0x20] sm:$0xff] %vm55, 0.0
    %62 = vst.msk [vmem:[#allocation2 + $0x28] sm:$0x3] %vm58, 0.0
    %v63 = vld [vmem:[%s0] sm:$0xff]
    %v64 = vld [vmem:[%s0 + $0x8] sm:$0xff]
    %v65 = vld [vmem:[%s0 + $0x10] sm:$0xff]
    %v66 = vld [vmem:[%s0 + $0x18] sm:$0xff]
    %vm67 = vcmask 15360
    %68 = vst.msk [vmem:[#allocation2 + $0x1] sm:$0xff] %vm67, %v63
    %69 = vst.msk [vmem:[#allocation2 + $0x9] sm:$0xff] %vm67, %v64
    %70 = vst.msk [vmem:[#allocation2 + $0x19] sm:$0xff] %vm67, %v65
    %71 = vst.msk [vmem:[#allocation2 + $0x21] sm:$0xff] %vm67, %v66
    %v72 = vld [vmem:[#allocation2] sm:$0xff]
    %v73 = vld [vmem:[#allocation2 + $0x8] sm:$0xff]
    %v74 = vld [vmem:[#allocation2 + $0x10] sm:$0x3]
    %v75 = vld [vmem:[#allocation2 + $0x18] sm:$0xff]
    %v76 = vld [vmem:[#allocation2 + $0x20] sm:$0xff]
    %v77 = vld [vmem:[#allocation2 + $0x28] sm:$0x3]
    %v78 = vld [vmem:[%s1] sm:$0x3]
    %vm85 = vcmask 1046528
    %v86 = vrot.slane %v72, 1
    %v87 = vrot.slane %v73, 1
    %v88 = vsel %vm85, %v86, %v87
    %v89 = vrot.slane %v74, 1
    %v90 = vsel %vm85, %v87, %v89
    %v91 = vrot.slane %v75, 1
    %v92 = vrot.slane %v76, 1
    %v93 = vsel %vm85, %v91, %v92
    %v94 = vrot.slane %v77, 1
    %v95 = vsel %vm85, %v92, %v94
    %s96 = scalar_lea.vmem %s1, 2
    %v97 = vld [vmem:[%s96] sm:$0x3]
    %v98 = vsel %vm67, %v88, 0
    %v100 = vsel %vm67, %v90, 0
    %v102 = vsel %vm67, %v93, 0
    %v104 = vsel %vm67, %v95, 0
    %vm106 = vcmask 1041408
    %v108 = vsel %vm106, %v97, 0
    %110 = vmatprep.subr.mxu0 0.0
    %111 = vmatpush1.msra.mxu0 0.0
    %112 = vmatprep.subr.mxu0 0.0
    %113 = vmatpush1.msra.mxu0 0.0
    %114 = vmatprep.subr.mxu0 0.0
    %115 = vmatpush1.msra.mxu0 0.0
    %116 = vmatprep.subr.mxu0 0.0
    %117 = vmatpush1.msra.mxu0 0.0
    %118 = vmatprep.subr.mxu0 0.0
    %119 = vmatpush1.msra.mxu0 0.0
    %120 = vmatprep.subr.mxu0 0.0
    %121 = vmatpush1.msra.mxu0 0.0
    %122 = vmatprep.subr.mxu0 0.0
    %123 = vmatpush1.msra.mxu0 0.0
    %124 = vmatprep.subr.mxu0 0.0
    %125 = vmatpush1.msra.mxu0 0.0
    %126 = vmatprep.subr.mxu0 0.0
    %127 = vmatpush1.msra.mxu0 0.0
    %128 = vmatprep.subr.mxu0 0.0
    %129 = vmatpush1.msra.mxu0 0.0
    %130 = vmatprep.subr.mxu0 0.0
    %131 = vmatpush1.msra.mxu0 0.0
    %132 = vmatprep.subr.mxu0 0.0
    %133 = vmatpush1.msra.mxu0 0.0
    %134 = vmatprep.subr.mxu0 0.0
    %135 = vmatpush1.msra.mxu0 0.0
    %136 = vmatprep.subr.mxu0 0.0
    %137 = vmatpush1.msra.mxu0 0.0
    %138 = vmatprep.subr.mxu0 0.0
    %139 = vmatpush1.msra.mxu0 0.0
    %140 = vmatprep.subr.mxu0 0.0
    %141 = vmatpush1.msra.mxu0 %v108
    %142 = vmatprep.subr.mxu0 0.0
    %143 = vmatpush2.msra.mxu0 0.0
    %144 = vmatprep.subr.mxu0 0.0
    %145 = vmatpush2.msra.mxu0 0.0
    %146 = vmatprep.subr.mxu0 0.0
    %147 = vmatpush2.msra.mxu0 0.0
    %148 = vmatprep.subr.mxu0 0.0
    %149 = vmatpush2.msra.mxu0 0.0
    %150 = vmatprep.subr.mxu0 0.0
    %151 = vmatpush2.msra.mxu0 0.0
    %152 = vmatprep.subr.mxu0 0.0
    %153 = vmatpush2.msra.mxu0 0.0
    %154 = vmatprep.subr.mxu0 0.0
    %155 = vmatpush2.msra.mxu0 0.0
    %156 = vmatprep.subr.mxu0 0.0
    %157 = vmatpush2.msra.mxu0 0.0
    %158 = vmatprep.subr.mxu0 0.0
    %159 = vmatpush2.msra.mxu0 0.0
    %160 = vmatprep.subr.mxu0 0.0
    %161 = vmatpush2.msra.mxu0 0.0
    %162 = vmatprep.subr.mxu0 0.0
    %163 = vmatpush2.msra.mxu0 0.0
    %164 = vmatprep.subr.mxu0 0.0
    %165 = vmatpush2.msra.mxu0 0.0
    %166 = vmatprep.subr.mxu0 0.0
    %167 = vmatpush2.msra.mxu0 0.0
    %168 = vmatprep.subr.mxu0 0.0
    %169 = vmatpush2.msra.mxu0 0.0
    %170 = vmatprep.subr.mxu0 0.0
    %171 = vmatpush2.msra.mxu0 0.0
    %172 = vmatprep.subr.mxu0 0.0
    %173 = vmatpush2.msra.mxu0 0.0
    %174 = vmatprep.mubr.f32.mxu0 0.0
    %175 = vmatmul.mubr.f32.gmra.mxu0 %v98
    %v176 = vpop.f32.mrf.mxu0
    %v177 = vadd.f32 0.0, %v176
    %v178 = vpop.f32.mrf.mxu0
    %179 = vmatprep.mubr.f32.mxu0 0.0
    %180 = vmatmul.mubr.f32.gmra.mxu0 %v100
    %v181 = vpop.f32.mrf.mxu0
    %v182 = vadd.f32 0.0, %v181
    %v183 = vpop.f32.mrf.mxu0
    %184 = vmatprep.mubr.f32.mxu0 0.0
    %185 = vmatmul.mubr.f32.gmra.mxu0 %v102
    %v186 = vpop.f32.mrf.mxu0
    %v187 = vadd.f32 0.0, %v186
    %v188 = vpop.f32.mrf.mxu0
    %189 = vmatprep.mubr.f32.mxu0 0.0
    %190 = vmatmul.mubr.f32.gmra.mxu0 %v104
    %v191 = vpop.f32.mrf.mxu0
    %v192 = vadd.f32 0.0, %v191
    %v193 = vpop.f32.mrf.mxu0
    %194 = vdwg.mxu0
    %v195 = vsel %vm67, %v72, 0
    %v197 = vsel %vm67, %v73, 0
    %v199 = vsel %vm67, %v75, 0
    %v201 = vsel %vm67, %v76, 0
    %v204 = vsel %vm106, %v78, 0
    %206 = vmatprep.subr.mxu0 0.0
    %207 = vmatpush1.msra.mxu0 0.0
    %208 = vmatprep.subr.mxu0 0.0
    %209 = vmatpush1.msra.mxu0 0.0
    %210 = vmatprep.subr.mxu0 0.0
    %211 = vmatpush1.msra.mxu0 0.0
    %212 = vmatprep.subr.mxu0 0.0
    %213 = vmatpush1.msra.mxu0 0.0
    %214 = vmatprep.subr.mxu0 0.0
    %215 = vmatpush1.msra.mxu0 0.0
    %216 = vmatprep.subr.mxu0 0.0
    %217 = vmatpush1.msra.mxu0 0.0
    %218 = vmatprep.subr.mxu0 0.0
    %219 = vmatpush1.msra.mxu0 0.0
    %220 = vmatprep.subr.mxu0 0.0
    %221 = vmatpush1.msra.mxu0 0.0
    %222 = vmatprep.subr.mxu0 0.0
    %223 = vmatpush1.msra.mxu0 0.0
    %224 = vmatprep.subr.mxu0 0.0
    %225 = vmatpush1.msra.mxu0 0.0
    %226 = vmatprep.subr.mxu0 0.0
    %227 = vmatpush1.msra.mxu0 0.0
    %228 = vmatprep.subr.mxu0 0.0
    %229 = vmatpush1.msra.mxu0 0.0
    %230 = vmatprep.subr.mxu0 0.0
    %231 = vmatpush1.msra.mxu0 0.0
    %232 = vmatprep.subr.mxu0 0.0
    %233 = vmatpush1.msra.mxu0 0.0
    %234 = vmatprep.subr.mxu0 0.0
    %235 = vmatpush1.msra.mxu0 0.0
    %236 = vmatprep.subr.mxu0 0.0
    %237 = vmatpush1.msra.mxu0 %v204
    %238 = vmatprep.subr.mxu0 0.0
    %239 = vmatpush2.msra.mxu0 0.0
    %240 = vmatprep.subr.mxu0 0.0
    %241 = vmatpush2.msra.mxu0 0.0
    %242 = vmatprep.subr.mxu0 0.0
    %243 = vmatpush2.msra.mxu0 0.0
    %244 = vmatprep.subr.mxu0 0.0
    %245 = vmatpush2.msra.mxu0 0.0
    %246 = vmatprep.subr.mxu0 0.0
    %247 = vmatpush2.msra.mxu0 0.0
    %248 = vmatprep.subr.mxu0 0.0
    %249 = vmatpush2.msra.mxu0 0.0
    %250 = vmatprep.subr.mxu0 0.0
    %251 = vmatpush2.msra.mxu0 0.0
    %252 = vmatprep.subr.mxu0 0.0
    %253 = vmatpush2.msra.mxu0 0.0
    %254 = vmatprep.subr.mxu0 0.0
    %255 = vmatpush2.msra.mxu0 0.0
    %256 = vmatprep.subr.mxu0 0.0
    %257 = vmatpush2.msra.mxu0 0.0
    %258 = vmatprep.subr.mxu0 0.0
    %259 = vmatpush2.msra.mxu0 0.0
    %260 = vmatprep.subr.mxu0 0.0
    %261 = vmatpush2.msra.mxu0 0.0
    %262 = vmatprep.subr.mxu0 0.0
    %263 = vmatpush2.msra.mxu0 0.0
    %264 = vmatprep.subr.mxu0 0.0
    %265 = vmatpush2.msra.mxu0 0.0
    %266 = vmatprep.subr.mxu0 0.0
    %267 = vmatpush2.msra.mxu0 0.0
    %268 = vmatprep.subr.mxu0 0.0
    %269 = vmatpush2.msra.mxu0 0.0
    %270 = vmatprep.mubr.f32.mxu0 0.0
    %271 = vmatmul.mubr.f32.gmra.mxu0 %v195
    %v272 = vpop.f32.mrf.mxu0
    %v273 = vadd.f32 %v177, %v272
    %v274 = vpop.f32.mrf.mxu0
    %275 = vmatprep.mubr.f32.mxu0 0.0
    %276 = vmatmul.mubr.f32.gmra.mxu0 %v197
    %v277 = vpop.f32.mrf.mxu0
    %v278 = vadd.f32 %v182, %v277
    %v279 = vpop.f32.mrf.mxu0
    %280 = vmatprep.mubr.f32.mxu0 0.0
    %281 = vmatmul.mubr.f32.gmra.mxu0 %v199
    %v282 = vpop.f32.mrf.mxu0
    %v283 = vadd.f32 %v187, %v282
    %v284 = vpop.f32.mrf.mxu0
    %285 = vmatprep.mubr.f32.mxu0 0.0
    %286 = vmatmul.mubr.f32.gmra.mxu0 %v201
    %v287 = vpop.f32.mrf.mxu0
    %v288 = vadd.f32 %v192, %v287
    %v289 = vpop.f32.mrf.mxu0
    %290 = vdwg.mxu0
    %vm291 = vcmask 1045504
    %v292 = vrot.slane %v72, 2
    %v293 = vrot.slane %v73, 2
    %v294 = vsel %vm291, %v292, %v293
    %v295 = vrot.slane %v74, 2
    %v296 = vsel %vm291, %v293, %v295
    %v297 = vrot.slane %v75, 2
    %v298 = vrot.slane %v76, 2
    %v299 = vsel %vm291, %v297, %v298
    %v300 = vrot.slane %v77, 2
    %v301 = vsel %vm291, %v298, %v300
    %s302 = scalar_lea.vmem %s1, 4
    %v303 = vld [vmem:[%s302] sm:$0x3]
    %v304 = vsel %vm67, %v294, 0
    %v306 = vsel %vm67, %v296, 0
    %v308 = vsel %vm67, %v299, 0
    %v310 = vsel %vm67, %v301, 0
    %v313 = vsel %vm106, %v303, 0
    %315 = vmatprep.subr.mxu0 0.0
    %316 = vmatpush1.msra.mxu0 0.0
    %317 = vmatprep.subr.mxu0 0.0
    %318 = vmatpush1.msra.mxu0 0.0
    %319 = vmatprep.subr.mxu0 0.0
    %320 = vmatpush1.msra.mxu0 0.0
    %321 = vmatprep.subr.mxu0 0.0
    %322 = vmatpush1.msra.mxu0 0.0
    %323 = vmatprep.subr.mxu0 0.0
    %324 = vmatpush1.msra.mxu0 0.0
    %325 = vmatprep.subr.mxu0 0.0
    %326 = vmatpush1.msra.mxu0 0.0
    %327 = vmatprep.subr.mxu0 0.0
    %328 = vmatpush1.msra.mxu0 0.0
    %329 = vmatprep.subr.mxu0 0.0
    %330 = vmatpush1.msra.mxu0 0.0
    %331 = vmatprep.subr.mxu0 0.0
    %332 = vmatpush1.msra.mxu0 0.0
    %333 = vmatprep.subr.mxu0 0.0
    %334 = vmatpush1.msra.mxu0 0.0
    %335 = vmatprep.subr.mxu0 0.0
    %336 = vmatpush1.msra.mxu0 0.0
    %337 = vmatprep.subr.mxu0 0.0
    %338 = vmatpush1.msra.mxu0 0.0
    %339 = vmatprep.subr.mxu0 0.0
    %340 = vmatpush1.msra.mxu0 0.0
    %341 = vmatprep.subr.mxu0 0.0
    %342 = vmatpush1.msra.mxu0 0.0
    %343 = vmatprep.subr.mxu0 0.0
    %344 = vmatpush1.msra.mxu0 0.0
    %345 = vmatprep.subr.mxu0 0.0
    %346 = vmatpush1.msra.mxu0 %v313
    %347 = vmatprep.subr.mxu0 0.0
    %348 = vmatpush2.msra.mxu0 0.0
    %349 = vmatprep.subr.mxu0 0.0
    %350 = vmatpush2.msra.mxu0 0.0
    %351 = vmatprep.subr.mxu0 0.0
    %352 = vmatpush2.msra.mxu0 0.0
    %353 = vmatprep.subr.mxu0 0.0
    %354 = vmatpush2.msra.mxu0 0.0
    %355 = vmatprep.subr.mxu0 0.0
    %356 = vmatpush2.msra.mxu0 0.0
    %357 = vmatprep.subr.mxu0 0.0
    %358 = vmatpush2.msra.mxu0 0.0
    %359 = vmatprep.subr.mxu0 0.0
    %360 = vmatpush2.msra.mxu0 0.0
    %361 = vmatprep.subr.mxu0 0.0
    %362 = vmatpush2.msra.mxu0 0.0
    %363 = vmatprep.subr.mxu0 0.0
    %364 = vmatpush2.msra.mxu0 0.0
    %365 = vmatprep.subr.mxu0 0.0
    %366 = vmatpush2.msra.mxu0 0.0
    %367 = vmatprep.subr.mxu0 0.0
    %368 = vmatpush2.msra.mxu0 0.0
    %369 = vmatprep.subr.mxu0 0.0
    %370 = vmatpush2.msra.mxu0 0.0
    %371 = vmatprep.subr.mxu0 0.0
    %372 = vmatpush2.msra.mxu0 0.0
    %373 = vmatprep.subr.mxu0 0.0
    %374 = vmatpush2.msra.mxu0 0.0
    %375 = vmatprep.subr.mxu0 0.0
    %376 = vmatpush2.msra.mxu0 0.0
    %377 = vmatprep.subr.mxu0 0.0
    %378 = vmatpush2.msra.mxu0 0.0
    %379 = vmatprep.mubr.f32.mxu0 0.0
    %380 = vmatmul.mubr.f32.gmra.mxu0 %v304
    %v381 = vpop.f32.mrf.mxu0
    %v382 = vadd.f32 0.0, %v381
    %v383 = vpop.f32.mrf.mxu0
    %384 = vmatprep.mubr.f32.mxu0 0.0
    %385 = vmatmul.mubr.f32.gmra.mxu0 %v306
    %v386 = vpop.f32.mrf.mxu0
    %v387 = vadd.f32 0.0, %v386
    %v388 = vpop.f32.mrf.mxu0
    %389 = vmatprep.mubr.f32.mxu0 0.0
    %390 = vmatmul.mubr.f32.gmra.mxu0 %v308
    %v391 = vpop.f32.mrf.mxu0
    %v392 = vadd.f32 0.0, %v391
    %v393 = vpop.f32.mrf.mxu0
    %394 = vmatprep.mubr.f32.mxu0 0.0
    %395 = vmatmul.mubr.f32.gmra.mxu0 %v310
    %v396 = vpop.f32.mrf.mxu0
    %v397 = vadd.f32 0.0, %v396
    %v398 = vpop.f32.mrf.mxu0
    %399 = vdwg.mxu0
    %v400 = vadd.f32 %v273, %v382
    %v401 = vadd.f32 %v278, %v387
    %v402 = vadd.f32 %v283, %v392
    %v403 = vadd.f32 %v288, %v397
    %v404 = vld [vmem:[%s2] sm:$0x1]
    %v406 = vlaneseq
    %v407 = vshrl.u32 %v406, 7
    %v408 = vsub.s32 0, %v407
    %v409 = vrot.slane %v404, %v408
    %v411 = vadd.f32 %v400, %v409
    %v412 = vadd.f32 %v401, %v409
    %v413 = vadd.f32 %v402, %v409
    %v414 = vadd.f32 %v403, %v409
    %v415 = vmax.f32 %v411, 0.0
    %v416 = vmax.f32 %v412, 0.0
    %v417 = vmax.f32 %v413, 0.0
    %v418 = vmax.f32 %v414, 0.0
    %419 = vst.msk [vmem:[#allocation2 + $0x1] sm:$0xff] %vm55, %v415
    %420 = vst.msk [vmem:[#allocation2 + $0x9] sm:$0xff] %vm55, %v416
    %421 = vst.msk [vmem:[#allocation2 + $0x19] sm:$0xff] %vm55, %v417
    %422 = vst.msk [vmem:[#allocation2 + $0x21] sm:$0xff] %vm55, %v418
    %v423 = vld [vmem:[#allocation2] sm:$0xff]
    %v424 = vld [vmem:[#allocation2 + $0x8] sm:$0xff]
    %v425 = vld [vmem:[#allocation2 + $0x10] sm:$0x3]
    %v426 = vld [vmem:[#allocation2 + $0x18] sm:$0xff]
    %v427 = vld [vmem:[#allocation2 + $0x20] sm:$0xff]
    %v428 = vld [vmem:[#allocation2 + $0x28] sm:$0x3]
    %v429 = vld [vmem:[#allocation3] sm:$0xff]
    %v430 = vld [vmem:[#allocation3 + $0x8] sm:$0xff]
    %v437 = vrot.slane %v423, 1
    %v438 = vrot.slane %v424, 1
    %v439 = vsel %vm85, %v437, %v438
    %v440 = vrot.slane %v425, 1
    %v441 = vsel %vm85, %v438, %v440
    %v442 = vrot.slane %v426, 1
    %v443 = vrot.slane %v427, 1
    %v444 = vsel %vm85, %v442, %v443
    %v445 = vrot.slane %v428, 1
    %v446 = vsel %vm85, %v443, %v445
    %s447 = scalar_lea.vmem [#allocation3], 16
    %v448 = vld [vmem:[%s447] sm:$0xff]
    %v449 = vld [vmem:[%s447 + $0x8] sm:$0xff]
    %v450 = vsel %vm55, %v439, 0
    %v452 = vsel %vm55, %v441, 0
    %v454 = vsel %vm55, %v444, 0
    %v456 = vsel %vm55, %v446, 0
    %458 = vmatprep.subr.mxu0 0.0
    %459 = vmatpush1.msra.mxu0 0.0
    %460 = vmatprep.subr.mxu0 0.0
    %461 = vmatpush1.msra.mxu0 0.0
    %462 = vmatprep.subr.mxu0 0.0
    %463 = vmatpush1.msra.mxu0 0.0
    %464 = vmatprep.subr.mxu0 0.0
    %465 = vmatpush1.msra.mxu0 0.0
    %466 = vmatprep.subr.mxu0 0.0
    %467 = vmatpush1.msra.mxu0 0.0
    %468 = vmatprep.subr.mxu0 0.0
    %469 = vmatpush1.msra.mxu0 0.0
    %470 = vmatprep.subr.mxu0 0.0
    %471 = vmatpush1.msra.mxu0 0.0
    %472 = vmatprep.subr.mxu0 0.0
    %473 = vmatpush1.msra.mxu0 0.0
    %474 = vmatprep.subr.mxu0 0.0
    %475 = vmatpush1.msra.mxu0 0.0
    %476 = vmatprep.subr.mxu0 0.0
    %477 = vmatpush1.msra.mxu0 0.0
    %478 = vmatprep.subr.mxu0 0.0
    %479 = vmatpush1.msra.mxu0 0.0
    %480 = vmatprep.subr.mxu0 0.0
    %481 = vmatpush1.msra.mxu0 0.0
    %482 = vmatprep.subr.mxu0 0.0
    %483 = vmatpush1.msra.mxu0 0.0
    %484 = vmatprep.subr.mxu0 0.0
    %485 = vmatpush1.msra.mxu0 0.0
    %486 = vmatprep.subr.mxu0 0.0
    %487 = vmatpush1.msra.mxu0 %v449
    %488 = vmatprep.subr.mxu0 0.0
    %489 = vmatpush1.msra.mxu0 %v448
    %490 = vmatprep.subr.mxu0 0.0
    %491 = vmatpush2.msra.mxu0 0.0
    %492 = vmatprep.subr.mxu0 0.0
    %493 = vmatpush2.msra.mxu0 0.0
    %494 = vmatprep.subr.mxu0 0.0
    %495 = vmatpush2.msra.mxu0 0.0
    %496 = vmatprep.subr.mxu0 0.0
    %497 = vmatpush2.msra.mxu0 0.0
    %498 = vmatprep.subr.mxu0 0.0
    %499 = vmatpush2.msra.mxu0 0.0
    %500 = vmatprep.subr.mxu0 0.0
    %501 = vmatpush2.msra.mxu0 0.0
    %502 = vmatprep.subr.mxu0 0.0
    %503 = vmatpush2.msra.mxu0 0.0
    %504 = vmatprep.subr.mxu0 0.0
    %505 = vmatpush2.msra.mxu0 0.0
    %506 = vmatprep.subr.mxu0 0.0
    %507 = vmatpush2.msra.mxu0 0.0
    %508 = vmatprep.subr.mxu0 0.0
    %509 = vmatpush2.msra.mxu0 0.0
    %510 = vmatprep.subr.mxu0 0.0
    %511 = vmatpush2.msra.mxu0 0.0
    %512 = vmatprep.subr.mxu0 0.0
    %513 = vmatpush2.msra.mxu0 0.0
    %514 = vmatprep.subr.mxu0 0.0
    %515 = vmatpush2.msra.mxu0 0.0
    %516 = vmatprep.subr.mxu0 0.0
    %517 = vmatpush2.msra.mxu0 0.0
    %518 = vmatprep.subr.mxu0 0.0
    %519 = vmatpush2.msra.mxu0 0.0
    %520 = vmatprep.subr.mxu0 0.0
    %521 = vmatpush2.msra.mxu0 0.0
    %522 = vmatprep.mubr.f32.mxu0 0.0
    %523 = vmatmul.mubr.f32.gmra.mxu0 %v450
    %v524 = vpop.f32.mrf.mxu0
    %v525 = vadd.f32 0.0, %v524
    %v526 = vpop.f32.mrf.mxu0
    %527 = vmatprep.mubr.f32.mxu0 0.0
    %528 = vmatmul.mubr.f32.gmra.mxu0 %v452
    %v529 = vpop.f32.mrf.mxu0
    %v530 = vadd.f32 0.0, %v529
    %v531 = vpop.f32.mrf.mxu0
    %532 = vmatprep.mubr.f32.mxu0 0.0
    %533 = vmatmul.mubr.f32.gmra.mxu0 %v454
    %v534 = vpop.f32.mrf.mxu0
    %v535 = vadd.f32 0.0, %v534
    %v536 = vpop.f32.mrf.mxu0
    %537 = vmatprep.mubr.f32.mxu0 0.0
    %538 = vmatmul.mubr.f32.gmra.mxu0 %v456
    %v539 = vpop.f32.mrf.mxu0
    %v540 = vadd.f32 0.0, %v539
    %v541 = vpop.f32.mrf.mxu0
    %542 = vdwg.mxu0
    %v543 = vsel %vm55, %v423, 0
    %v545 = vsel %vm55, %v424, 0
    %v547 = vsel %vm55, %v426, 0
    %v549 = vsel %vm55, %v427, 0
    %551 = vmatprep.subr.mxu0 0.0
    %552 = vmatpush1.msra.mxu0 0.0
    %553 = vmatprep.subr.mxu0 0.0
    %554 = vmatpush1.msra.mxu0 0.0
    %555 = vmatprep.subr.mxu0 0.0
    %556 = vmatpush1.msra.mxu0 0.0
    %557 = vmatprep.subr.mxu0 0.0
    %558 = vmatpush1.msra.mxu0 0.0
    %559 = vmatprep.subr.mxu0 0.0
    %560 = vmatpush1.msra.mxu0 0.0
    %561 = vmatprep.subr.mxu0 0.0
    %562 = vmatpush1.msra.mxu0 0.0
    %563 = vmatprep.subr.mxu0 0.0
    %564 = vmatpush1.msra.mxu0 0.0
    %565 = vmatprep.subr.mxu0 0.0
    %566 = vmatpush1.msra.mxu0 0.0
    %567 = vmatprep.subr.mxu0 0.0
    %568 = vmatpush1.msra.mxu0 0.0
    %569 = vmatprep.subr.mxu0 0.0
    %570 = vmatpush1.msra.mxu0 0.0
    %571 = vmatprep.subr.mxu0 0.0
    %572 = vmatpush1.msra.mxu0 0.0
    %573 = vmatprep.subr.mxu0 0.0
    %574 = vmatpush1.msra.mxu0 0.0
    %575 = vmatprep.subr.mxu0 0.0
    %576 = vmatpush1.msra.mxu0 0.0
    %577 = vmatprep.subr.mxu0 0.0
    %578 = vmatpush1.msra.mxu0 0.0
    %579 = vmatprep.subr.mxu0 0.0
    %580 = vmatpush1.msra.mxu0 %v430
    %581 = vmatprep.subr.mxu0 0.0
    %582 = vmatpush1.msra.mxu0 %v429
    %583 = vmatprep.subr.mxu0 0.0
    %584 = vmatpush2.msra.mxu0 0.0
    %585 = vmatprep.subr.mxu0 0.0
    %586 = vmatpush2.msra.mxu0 0.0
    %587 = vmatprep.subr.mxu0 0.0
    %588 = vmatpush2.msra.mxu0 0.0
    %589 = vmatprep.subr.mxu0 0.0
    %590 = vmatpush2.msra.mxu0 0.0
    %591 = vmatprep.subr.mxu0 0.0
    %592 = vmatpush2.msra.mxu0 0.0
    %593 = vmatprep.subr.mxu0 0.0
    %594 = vmatpush2.msra.mxu0 0.0
    %595 = vmatprep.subr.mxu0 0.0
    %596 = vmatpush2.msra.mxu0 0.0
    %597 = vmatprep.subr.mxu0 0.0
    %598 = vmatpush2.msra.mxu0 0.0
    %599 = vmatprep.subr.mxu0 0.0
    %600 = vmatpush2.msra.mxu0 0.0
    %601 = vmatprep.subr.mxu0 0.0
    %602 = vmatpush2.msra.mxu0 0.0
    %603 = vmatprep.subr.mxu0 0.0
    %604 = vmatpush2.msra.mxu0 0.0
    %605 = vmatprep.subr.mxu0 0.0
    %606 = vmatpush2.msra.mxu0 0.0
    %607 = vmatprep.subr.mxu0 0.0
    %608 = vmatpush2.msra.mxu0 0.0
    %609 = vmatprep.subr.mxu0 0.0
    %610 = vmatpush2.msra.mxu0 0.0
    %611 = vmatprep.subr.mxu0 0.0
    %612 = vmatpush2.msra.mxu0 0.0
    %613 = vmatprep.subr.mxu0 0.0
    %614 = vmatpush2.msra.mxu0 0.0
    %615 = vmatprep.mubr.f32.mxu0 0.0
    %616 = vmatmul.mubr.f32.gmra.mxu0 %v543
    %v617 = vpop.f32.mrf.mxu0
    %v618 = vadd.f32 %v525, %v617
    %v619 = vpop.f32.mrf.mxu0
    %620 = vmatprep.mubr.f32.mxu0 0.0
    %621 = vmatmul.mubr.f32.gmra.mxu0 %v545
    %v622 = vpop.f32.mrf.mxu0
    %v623 = vadd.f32 %v530, %v622
    %v624 = vpop.f32.mrf.mxu0
    %625 = vmatprep.mubr.f32.mxu0 0.0
    %626 = vmatmul.mubr.f32.gmra.mxu0 %v547
    %v627 = vpop.f32.mrf.mxu0
    %v628 = vadd.f32 %v535, %v627
    %v629 = vpop.f32.mrf.mxu0
    %630 = vmatprep.mubr.f32.mxu0 0.0
    %631 = vmatmul.mubr.f32.gmra.mxu0 %v549
    %v632 = vpop.f32.mrf.mxu0
    %v633 = vadd.f32 %v540, %v632
    %v634 = vpop.f32.mrf.mxu0
    %635 = vdwg.mxu0
    %v636 = vrot.slane %v423, 2
    %v637 = vrot.slane %v424, 2
    %v638 = vsel %vm291, %v636, %v637
    %v639 = vrot.slane %v425, 2
    %v640 = vsel %vm291, %v637, %v639
    %v641 = vrot.slane %v426, 2
    %v642 = vrot.slane %v427, 2
    %v643 = vsel %vm291, %v641, %v642
    %v644 = vrot.slane %v428, 2
    %v645 = vsel %vm291, %v642, %v644
    %s646 = scalar_lea.vmem [#allocation3], 32
    %v647 = vld [vmem:[%s646] sm:$0xff]
    %v648 = vld [vmem:[%s646 + $0x8] sm:$0xff]
    %v649 = vsel %vm55, %v638, 0
    %v651 = vsel %vm55, %v640, 0
    %v653 = vsel %vm55, %v643, 0
    %v655 = vsel %vm55, %v645, 0
    %657 = vmatprep.subr.mxu0 0.0
    %658 = vmatpush1.msra.mxu0 0.0
    %659 = vmatprep.subr.mxu0 0.0
    %660 = vmatpush1.msra.mxu0 0.0
    %661 = vmatprep.subr.mxu0 0.0
    %662 = vmatpush1.msra.mxu0 0.0
    %663 = vmatprep.subr.mxu0 0.0
    %664 = vmatpush1.msra.mxu0 0.0
    %665 = vmatprep.subr.mxu0 0.0
    %666 = vmatpush1.msra.mxu0 0.0
    %667 = vmatprep.subr.mxu0 0.0
    %668 = vmatpush1.msra.mxu0 0.0
    %669 = vmatprep.subr.mxu0 0.0
    %670 = vmatpush1.msra.mxu0 0.0
    %671 = vmatprep.subr.mxu0 0.0
    %672 = vmatpush1.msra.mxu0 0.0
    %673 = vmatprep.subr.mxu0 0.0
    %674 = vmatpush1.msra.mxu0 0.0
    %675 = vmatprep.subr.mxu0 0.0
    %676 = vmatpush1.msra.mxu0 0.0
    %677 = vmatprep.subr.mxu0 0.0
    %678 = vmatpush1.msra.mxu0 0.0
    %679 = vmatprep.subr.mxu0 0.0
    %680 = vmatpush1.msra.mxu0 0.0
    %681 = vmatprep.subr.mxu0 0.0
    %682 = vmatpush1.msra.mxu0 0.0
    %683 = vmatprep.subr.mxu0 0.0
    %684 = vmatpush1.msra.mxu0 0.0
    %685 = vmatprep.subr.mxu0 0.0
    %686 = vmatpush1.msra.mxu0 %v648
    %687 = vmatprep.subr.mxu0 0.0
    %688 = vmatpush1.msra.mxu0 %v647
    %689 = vmatprep.subr.mxu0 0.0
    %690 = vmatpush2.msra.mxu0 0.0
    %691 = vmatprep.subr.mxu0 0.0
    %692 = vmatpush2.msra.mxu0 0.0
    %693 = vmatprep.subr.mxu0 0.0
    %694 = vmatpush2.msra.mxu0 0.0
    %695 = vmatprep.subr.mxu0 0.0
    %696 = vmatpush2.msra.mxu0 0.0
    %697 = vmatprep.subr.mxu0 0.0
    %698 = vmatpush2.msra.mxu0 0.0
    %699 = vmatprep.subr.mxu0 0.0
    %700 = vmatpush2.msra.mxu0 0.0
    %701 = vmatprep.subr.mxu0 0.0
    %702 = vmatpush2.msra.mxu0 0.0
    %703 = vmatprep.subr.mxu0 0.0
    %704 = vmatpush2.msra.mxu0 0.0
    %705 = vmatprep.subr.mxu0 0.0
    %706 = vmatpush2.msra.mxu0 0.0
    %707 = vmatprep.subr.mxu0 0.0
    %708 = vmatpush2.msra.mxu0 0.0
    %709 = vmatprep.subr.mxu0 0.0
    %710 = vmatpush2.msra.mxu0 0.0
    %711 = vmatprep.subr.mxu0 0.0
    %712 = vmatpush2.msra.mxu0 0.0
    %713 = vmatprep.subr.mxu0 0.0
    %714 = vmatpush2.msra.mxu0 0.0
    %715 = vmatprep.subr.mxu0 0.0
    %716 = vmatpush2.msra.mxu0 0.0
    %717 = vmatprep.subr.mxu0 0.0
    %718 = vmatpush2.msra.mxu0 0.0
    %719 = vmatprep.subr.mxu0 0.0
    %720 = vmatpush2.msra.mxu0 0.0
    %721 = vmatprep.mubr.f32.mxu0 0.0
    %722 = vmatmul.mubr.f32.gmra.mxu0 %v649
    %v723 = vpop.f32.mrf.mxu0
    %v724 = vadd.f32 0.0, %v723
    %v725 = vpop.f32.mrf.mxu0
    %726 = vmatprep.mubr.f32.mxu0 0.0
    %727 = vmatmul.mubr.f32.gmra.mxu0 %v651
    %v728 = vpop.f32.mrf.mxu0
    %v729 = vadd.f32 0.0, %v728
    %v730 = vpop.f32.mrf.mxu0
    %731 = vmatprep.mubr.f32.mxu0 0.0
    %732 = vmatmul.mubr.f32.gmra.mxu0 %v653
    %v733 = vpop.f32.mrf.mxu0
    %v734 = vadd.f32 0.0, %v733
    %v735 = vpop.f32.mrf.mxu0
    %736 = vmatprep.mubr.f32.mxu0 0.0
    %737 = vmatmul.mubr.f32.gmra.mxu0 %v655
    %v738 = vpop.f32.mrf.mxu0
    %v739 = vadd.f32 0.0, %v738
    %v740 = vpop.f32.mrf.mxu0
    %741 = vdwg.mxu0
    %v742 = vadd.f32 %v618, %v724
    %v743 = vadd.f32 %v623, %v729
    %v744 = vadd.f32 %v628, %v734
    %v745 = vadd.f32 %v633, %v739
    %v746 = vld [vmem:[%s4] sm:$0x1]
    %v748 = vlaneseq
    %v749 = vshrl.u32 %v748, 7
    %v750 = vsub.s32 0, %v749
    %v751 = vrot.slane %v746, %v750
    %v753 = vadd.f32 %v742, %v751
    %v754 = vadd.f32 %v743, %v751
    %v755 = vadd.f32 %v744, %v751
    %v756 = vadd.f32 %v745, %v751
    %v757 = vmax.f32 %v753, 0.0
    %v758 = vmax.f32 %v754, 0.0
    %v759 = vmax.f32 %v755, 0.0
    %v760 = vmax.f32 %v756, 0.0
    %761 = vst.msk [vmem:[#allocation2 + $0x1] sm:$0xff] %vm55, %v757
    %762 = vst.msk [vmem:[#allocation2 + $0x9] sm:$0xff] %vm55, %v758
    %763 = vst.msk [vmem:[#allocation2 + $0x19] sm:$0xff] %vm55, %v759
    %764 = vst.msk [vmem:[#allocation2 + $0x21] sm:$0xff] %vm55, %v760
    %v765 = vld [vmem:[#allocation2] sm:$0xff]
    %v766 = vld [vmem:[#allocation2 + $0x8] sm:$0xff]
    %v767 = vld [vmem:[#allocation2 + $0x10] sm:$0x3]
    %v768 = vld [vmem:[#allocation2 + $0x18] sm:$0xff]
    %v769 = vld [vmem:[#allocation2 + $0x20] sm:$0xff]
    %v770 = vld [vmem:[#allocation2 + $0x28] sm:$0x3]
    %v771 = vld [vmem:[#allocation6] sm:$0xff]
    %v772 = vld [vmem:[#allocation6 + $0x8] sm:$0xff]
    %v779 = vrot.slane %v765, 1
    %v780 = vrot.slane %v766, 1
    %v781 = vsel %vm85, %v779, %v780
    %v782 = vrot.slane %v767, 1
    %v783 = vsel %vm85, %v780, %v782
    %v784 = vrot.slane %v768, 1
    %v785 = vrot.slane %v769, 1
    %v786 = vsel %vm85, %v784, %v785
    %v787 = vrot.slane %v770, 1
    %v788 = vsel %vm85, %v785, %v787
    %s789 = scalar_lea.vmem [#allocation6], 16
    %v790 = vld [vmem:[%s789] sm:$0xff]
    %v791 = vld [vmem:[%s789 + $0x8] sm:$0xff]
    %v792 = vsel %vm55, %v781, 0
    %v794 = vsel %vm55, %v783, 0
    %v796 = vsel %vm55, %v786, 0
    %v798 = vsel %vm55, %v788, 0
    %800 = vmatprep.subr.mxu0 0.0
    %801 = vmatpush1.msra.mxu0 0.0
    %802 = vmatprep.subr.mxu0 0.0
    %803 = vmatpush1.msra.mxu0 0.0
    %804 = vmatprep.subr.mxu0 0.0
    %805 = vmatpush1.msra.mxu0 0.0
    %806 = vmatprep.subr.mxu0 0.0
    %807 = vmatpush1.msra.mxu0 0.0
    %808 = vmatprep.subr.mxu0 0.0
    %809 = vmatpush1.msra.mxu0 0.0
    %810 = vmatprep.subr.mxu0 0.0
    %811 = vmatpush1.msra.mxu0 0.0
    %812 = vmatprep.subr.mxu0 0.0
    %813 = vmatpush1.msra.mxu0 0.0
    %814 = vmatprep.subr.mxu0 0.0
    %815 = vmatpush1.msra.mxu0 0.0
    %816 = vmatprep.subr.mxu0 0.0
    %817 = vmatpush1.msra.mxu0 0.0
    %818 = vmatprep.subr.mxu0 0.0
    %819 = vmatpush1.msra.mxu0 0.0
    %820 = vmatprep.subr.mxu0 0.0
    %821 = vmatpush1.msra.mxu0 0.0
    %822 = vmatprep.subr.mxu0 0.0
    %823 = vmatpush1.msra.mxu0 0.0
    %824 = vmatprep.subr.mxu0 0.0
    %825 = vmatpush1.msra.mxu0 0.0
    %826 = vmatprep.subr.mxu0 0.0
    %827 = vmatpush1.msra.mxu0 0.0
    %828 = vmatprep.subr.mxu0 0.0
    %829 = vmatpush1.msra.mxu0 %v791
    %830 = vmatprep.subr.mxu0 0.0
    %831 = vmatpush1.msra.mxu0 %v790
    %832 = vmatprep.subr.mxu0 0.0
    %833 = vmatpush2.msra.mxu0 0.0
    %834 = vmatprep.subr.mxu0 0.0
    %835 = vmatpush2.msra.mxu0 0.0
    %836 = vmatprep.subr.mxu0 0.0
    %837 = vmatpush2.msra.mxu0 0.0
    %838 = vmatprep.subr.mxu0 0.0
    %839 = vmatpush2.msra.mxu0 0.0
    %840 = vmatprep.subr.mxu0 0.0
    %841 = vmatpush2.msra.mxu0 0.0
    %842 = vmatprep.subr.mxu0 0.0
    %843 = vmatpush2.msra.mxu0 0.0
    %844 = vmatprep.subr.mxu0 0.0
    %845 = vmatpush2.msra.mxu0 0.0
    %846 = vmatprep.subr.mxu0 0.0
    %847 = vmatpush2.msra.mxu0 0.0
    %848 = vmatprep.subr.mxu0 0.0
    %849 = vmatpush2.msra.mxu0 0.0
    %850 = vmatprep.subr.mxu0 0.0
    %851 = vmatpush2.msra.mxu0 0.0
    %852 = vmatprep.subr.mxu0 0.0
    %853 = vmatpush2.msra.mxu0 0.0
    %854 = vmatprep.subr.mxu0 0.0
    %855 = vmatpush2.msra.mxu0 0.0
    %856 = vmatprep.subr.mxu0 0.0
    %857 = vmatpush2.msra.mxu0 0.0
    %858 = vmatprep.subr.mxu0 0.0
    %859 = vmatpush2.msra.mxu0 0.0
    %860 = vmatprep.subr.mxu0 0.0
    %861 = vmatpush2.msra.mxu0 0.0
    %862 = vmatprep.subr.mxu0 0.0
    %863 = vmatpush2.msra.mxu0 0.0
    %864 = vmatprep.mubr.f32.mxu0 0.0
    %865 = vmatmul.mubr.f32.gmra.mxu0 %v792
    %v866 = vpop.f32.mrf.mxu0
    %v867 = vadd.f32 0.0, %v866
    %v868 = vpop.f32.mrf.mxu0
    %869 = vmatprep.mubr.f32.mxu0 0.0
    %870 = vmatmul.mubr.f32.gmra.mxu0 %v794
    %v871 = vpop.f32.mrf.mxu0
    %v872 = vadd.f32 0.0, %v871
    %v873 = vpop.f32.mrf.mxu0
    %874 = vmatprep.mubr.f32.mxu0 0.0
    %875 = vmatmul.mubr.f32.gmra.mxu0 %v796
    %v876 = vpop.f32.mrf.mxu0
    %v877 = vadd.f32 0.0, %v876
    %v878 = vpop.f32.mrf.mxu0
    %879 = vmatprep.mubr.f32.mxu0 0.0
    %880 = vmatmul.mubr.f32.gmra.mxu0 %v798
    %v881 = vpop.f32.mrf.mxu0
    %v882 = vadd.f32 0.0, %v881
    %v883 = vpop.f32.mrf.mxu0
    %884 = vdwg.mxu0
    %v885 = vsel %vm55, %v765, 0
    %v887 = vsel %vm55, %v766, 0
    %v889 = vsel %vm55, %v768, 0
    %v891 = vsel %vm55, %v769, 0
    %893 = vmatprep.subr.mxu0 0.0
    %894 = vmatpush1.msra.mxu0 0.0
    %895 = vmatprep.subr.mxu0 0.0
    %896 = vmatpush1.msra.mxu0 0.0
    %897 = vmatprep.subr.mxu0 0.0
    %898 = vmatpush1.msra.mxu0 0.0
    %899 = vmatprep.subr.mxu0 0.0
    %900 = vmatpush1.msra.mxu0 0.0
    %901 = vmatprep.subr.mxu0 0.0
    %902 = vmatpush1.msra.mxu0 0.0
    %903 = vmatprep.subr.mxu0 0.0
    %904 = vmatpush1.msra.mxu0 0.0
    %905 = vmatprep.subr.mxu0 0.0
    %906 = vmatpush1.msra.mxu0 0.0
    %907 = vmatprep.subr.mxu0 0.0
    %908 = vmatpush1.msra.mxu0 0.0
    %909 = vmatprep.subr.mxu0 0.0
    %910 = vmatpush1.msra.mxu0 0.0
    %911 = vmatprep.subr.mxu0 0.0
    %912 = vmatpush1.msra.mxu0 0.0
    %913 = vmatprep.subr.mxu0 0.0
    %914 = vmatpush1.msra.mxu0 0.0
    %915 = vmatprep.subr.mxu0 0.0
    %916 = vmatpush1.msra.mxu0 0.0
    %917 = vmatprep.subr.mxu0 0.0
    %918 = vmatpush1.msra.mxu0 0.0
    %919 = vmatprep.subr.mxu0 0.0
    %920 = vmatpush1.msra.mxu0 0.0
    %921 = vmatprep.subr.mxu0 0.0
    %922 = vmatpush1.msra.mxu0 %v772
    %923 = vmatprep.subr.mxu0 0.0
    %924 = vmatpush1.msra.mxu0 %v771
    %925 = vmatprep.subr.mxu0 0.0
    %926 = vmatpush2.msra.mxu0 0.0
    %927 = vmatprep.subr.mxu0 0.0
    %928 = vmatpush2.msra.mxu0 0.0
    %929 = vmatprep.subr.mxu0 0.0
    %930 = vmatpush2.msra.mxu0 0.0
    %931 = vmatprep.subr.mxu0 0.0
    %932 = vmatpush2.msra.mxu0 0.0
    %933 = vmatprep.subr.mxu0 0.0
    %934 = vmatpush2.msra.mxu0 0.0
    %935 = vmatprep.subr.mxu0 0.0
    %936 = vmatpush2.msra.mxu0 0.0
    %937 = vmatprep.subr.mxu0 0.0
    %938 = vmatpush2.msra.mxu0 0.0
    %939 = vmatprep.subr.mxu0 0.0
    %940 = vmatpush2.msra.mxu0 0.0
    %941 = vmatprep.subr.mxu0 0.0
    %942 = vmatpush2.msra.mxu0 0.0
    %943 = vmatprep.subr.mxu0 0.0
    %944 = vmatpush2.msra.mxu0 0.0
    %945 = vmatprep.subr.mxu0 0.0
    %946 = vmatpush2.msra.mxu0 0.0
    %947 = vmatprep.subr.mxu0 0.0
    %948 = vmatpush2.msra.mxu0 0.0
    %949 = vmatprep.subr.mxu0 0.0
    %950 = vmatpush2.msra.mxu0 0.0
    %951 = vmatprep.subr.mxu0 0.0
    %952 = vmatpush2.msra.mxu0 0.0
    %953 = vmatprep.subr.mxu0 0.0
    %954 = vmatpush2.msra.mxu0 0.0
    %955 = vmatprep.subr.mxu0 0.0
    %956 = vmatpush2.msra.mxu0 0.0
    %957 = vmatprep.mubr.f32.mxu0 0.0
    %958 = vmatmul.mubr.f32.gmra.mxu0 %v885
    %v959 = vpop.f32.mrf.mxu0
    %v960 = vadd.f32 %v867, %v959
    %v961 = vpop.f32.mrf.mxu0
    %962 = vmatprep.mubr.f32.mxu0 0.0
    %963 = vmatmul.mubr.f32.gmra.mxu0 %v887
    %v964 = vpop.f32.mrf.mxu0
    %v965 = vadd.f32 %v872, %v964
    %v966 = vpop.f32.mrf.mxu0
    %967 = vmatprep.mubr.f32.mxu0 0.0
    %968 = vmatmul.mubr.f32.gmra.mxu0 %v889
    %v969 = vpop.f32.mrf.mxu0
    %v970 = vadd.f32 %v877, %v969
    %v971 = vpop.f32.mrf.mxu0
    %972 = vmatprep.mubr.f32.mxu0 0.0
    %973 = vmatmul.mubr.f32.gmra.mxu0 %v891
    %v974 = vpop.f32.mrf.mxu0
    %v975 = vadd.f32 %v882, %v974
    %v976 = vpop.f32.mrf.mxu0
    %977 = vdwg.mxu0
    %v978 = vrot.slane %v765, 2
    %v979 = vrot.slane %v766, 2
    %v980 = vsel %vm291, %v978, %v979
    %v981 = vrot.slane %v767, 2
    %v982 = vsel %vm291, %v979, %v981
    %v983 = vrot.slane %v768, 2
    %v984 = vrot.slane %v769, 2
    %v985 = vsel %vm291, %v983, %v984
    %v986 = vrot.slane %v770, 2
    %v987 = vsel %vm291, %v984, %v986
    %s988 = scalar_lea.vmem [#allocation6], 32
    %v989 = vld [vmem:[%s988] sm:$0xff]
    %v990 = vld [vmem:[%s988 + $0x8] sm:$0xff]
    %v991 = vsel %vm55, %v980, 0
    %v993 = vsel %vm55, %v982, 0
    %v995 = vsel %vm55, %v985, 0
    %v997 = vsel %vm55, %v987, 0
    %999 = vmatprep.subr.mxu0 0.0
    %1000 = vmatpush1.msra.mxu0 0.0
    %1001 = vmatprep.subr.mxu0 0.0
    %1002 = vmatpush1.msra.mxu0 0.0
    %1003 = vmatprep.subr.mxu0 0.0
    %1004 = vmatpush1.msra.mxu0 0.0
    %1005 = vmatprep.subr.mxu0 0.0
    %1006 = vmatpush1.msra.mxu0 0.0
    %1007 = vmatprep.subr.mxu0 0.0
    %1008 = vmatpush1.msra.mxu0 0.0
    %1009 = vmatprep.subr.mxu0 0.0
    %1010 = vmatpush1.msra.mxu0 0.0
    %1011 = vmatprep.subr.mxu0 0.0
    %1012 = vmatpush1.msra.mxu0 0.0
    %1013 = vmatprep.subr.mxu0 0.0
    %1014 = vmatpush1.msra.mxu0 0.0
    %1015 = vmatprep.subr.mxu0 0.0
    %1016 = vmatpush1.msra.mxu0 0.0
    %1017 = vmatprep.subr.mxu0 0.0
    %1018 = vmatpush1.msra.mxu0 0.0
    %1019 = vmatprep.subr.mxu0 0.0
    %1020 = vmatpush1.msra.mxu0 0.0
    %1021 = vmatprep.subr.mxu0 0.0
    %1022 = vmatpush1.msra.mxu0 0.0
    %1023 = vmatprep.subr.mxu0 0.0
    %1024 = vmatpush1.msra.mxu0 0.0
    %1025 = vmatprep.subr.mxu0 0.0
    %1026 = vmatpush1.msra.mxu0 0.0
    %1027 = vmatprep.subr.mxu0 0.0
    %1028 = vmatpush1.msra.mxu0 %v990
    %1029 = vmatprep.subr.mxu0 0.0
    %1030 = vmatpush1.msra.mxu0 %v989
    %1031 = vmatprep.subr.mxu0 0.0
    %1032 = vmatpush2.msra.mxu0 0.0
    %1033 = vmatprep.subr.mxu0 0.0
    %1034 = vmatpush2.msra.mxu0 0.0
    %1035 = vmatprep.subr.mxu0 0.0
    %1036 = vmatpush2.msra.mxu0 0.0
    %1037 = vmatprep.subr.mxu0 0.0
    %1038 = vmatpush2.msra.mxu0 0.0
    %1039 = vmatprep.subr.mxu0 0.0
    %1040 = vmatpush2.msra.mxu0 0.0
    %1041 = vmatprep.subr.mxu0 0.0
    %1042 = vmatpush2.msra.mxu0 0.0
    %1043 = vmatprep.subr.mxu0 0.0
    %1044 = vmatpush2.msra.mxu0 0.0
    %1045 = vmatprep.subr.mxu0 0.0
    %1046 = vmatpush2.msra.mxu0 0.0
    %1047 = vmatprep.subr.mxu0 0.0
    %1048 = vmatpush2.msra.mxu0 0.0
    %1049 = vmatprep.subr.mxu0 0.0
    %1050 = vmatpush2.msra.mxu0 0.0
    %1051 = vmatprep.subr.mxu0 0.0
    %1052 = vmatpush2.msra.mxu0 0.0
    %1053 = vmatprep.subr.mxu0 0.0
    %1054 = vmatpush2.msra.mxu0 0.0
    %1055 = vmatprep.subr.mxu0 0.0
    %1056 = vmatpush2.msra.mxu0 0.0
    %1057 = vmatprep.subr.mxu0 0.0
    %1058 = vmatpush2.msra.mxu0 0.0
    %1059 = vmatprep.subr.mxu0 0.0
    %1060 = vmatpush2.msra.mxu0 0.0
    %1061 = vmatprep.subr.mxu0 0.0
    %1062 = vmatpush2.msra.mxu0 0.0
    %1063 = vmatprep.mubr.f32.mxu0 0.0
    %1064 = vmatmul.mubr.f32.gmra.mxu0 %v991
    %v1065 = vpop.f32.mrf.mxu0
    %v1066 = vadd.f32 0.0, %v1065
    %v1067 = vpop.f32.mrf.mxu0
    %1068 = vmatprep.mubr.f32.mxu0 0.0
    %1069 = vmatmul.mubr.f32.gmra.mxu0 %v993
    %v1070 = vpop.f32.mrf.mxu0
    %v1071 = vadd.f32 0.0, %v1070
    %v1072 = vpop.f32.mrf.mxu0
    %1073 = vmatprep.mubr.f32.mxu0 0.0
    %1074 = vmatmul.mubr.f32.gmra.mxu0 %v995
    %v1075 = vpop.f32.mrf.mxu0
    %v1076 = vadd.f32 0.0, %v1075
    %v1077 = vpop.f32.mrf.mxu0
    %1078 = vmatprep.mubr.f32.mxu0 0.0
    %1079 = vmatmul.mubr.f32.gmra.mxu0 %v997
    %v1080 = vpop.f32.mrf.mxu0
    %v1081 = vadd.f32 0.0, %v1080
    %v1082 = vpop.f32.mrf.mxu0
    %1083 = vdwg.mxu0
    %v1084 = vadd.f32 %v960, %v1066
    %v1085 = vadd.f32 %v965, %v1071
    %v1086 = vadd.f32 %v970, %v1076
    %v1087 = vadd.f32 %v975, %v1081
    %v1088 = vld [vmem:[%s6] sm:$0x1]
    %v1090 = vlaneseq
    %v1091 = vshrl.u32 %v1090, 7
    %v1092 = vsub.s32 0, %v1091
    %v1093 = vrot.slane %v1088, %v1092
    %v1095 = vadd.f32 %v1084, %v1093
    %v1096 = vadd.f32 %v1085, %v1093
    %v1097 = vadd.f32 %v1086, %v1093
    %v1098 = vadd.f32 %v1087, %v1093
    %v1099 = vmax.f32 %v1095, 0.0
    %v1100 = vmax.f32 %v1096, 0.0
    %v1101 = vmax.f32 %v1097, 0.0
    %v1102 = vmax.f32 %v1098, 0.0
    %1103 = vst.msk [vmem:[#allocation8] sm:$0xff] %vm55, %v1099
    %1104 = vst.msk [vmem:[#allocation8 + $0x8] sm:$0xff] %vm55, %v1100
    %1105 = vst.msk [vmem:[#allocation8 + $0x10] sm:$0xff] %vm55, %v1101
    %1106 = vst.msk [vmem:[#allocation8 + $0x18] sm:$0xff] %vm55, %v1102
    // Predicated region
    $region38: #{tpu_custom_call.1} parent=1 // pred_check
      _
    $region39: #{tpu_custom_call.1} parent=1 // pred_check_branch
      %1108 = sbr.rel (0) target = $region41
    $region40: #{tpu_custom_call.1} parent=1 // pred_region
      %s1110 = ssub.s32 512, 512
      %1111 = vsyncadd [#allocation5], %s1110
      %s1112 = sshll.u32 [#allocation8], 4
      %s1113 = int_to_ptr.vmem [resolvable:$true] %s1112
      %1118 = dma.vmem_to_hbm [thread:$0]  %s1113, 512, %s7, [#allocation5], 128, 128, 8
    $region41: #{tpu_custom_call.1} parent=1 // pred_fallthru
      _
    // Predicated region
    $region42: #{tpu_custom_call.1} parent=1 // pred_check
      _
    $region43: #{tpu_custom_call.1} parent=1 // pred_check_branch
      %1120 = sbr.rel (0) target = $region45
    $region44: #{tpu_custom_call.1} parent=1 // pred_region
      %1121 = dma.done [#allocation5], 512
    $region45: #{tpu_custom_call.1} parent=1 // pred_fallthru
      _
    %1122 = vsyncpa [#allocation4], 1
    %1123 = vsyncpa [#allocation7], 1
    %1124 = vsyncpa [#allocation5], 1

</llo_original>
